<compile_context>
chip_gen: v7x
topology: tpu7x:2x2x1
jax: 0.10.0
libtpu: 0.0.40
codegen_flags: <defaults>
</compile_context>

<pallas_src>
import functools

import jax
import jax.numpy as jnp
from jax.experimental import pallas as pl
from jax.experimental.pallas import tpu as pltpu

ALPHA = 0.25
GAMMA = 2          # integer -> explicit square in the kernel (no float pow)

_LANE = 128        # vreg lane width
_SUB = 8           # f32 sublane tile


def _round_up(a, b):
    return pl.cdiv(a, b) * b


def _focal_loss_kernel(x_ref, t_ref, out_ref, *, valid_rows, tr, steps,
                       two_axes, full):
    """One grid step: focal loss of a (tr, 128) block folded into a per-core
    (8, 128) partial-sum slab that stays resident in the output VMEM buffer
    across the (arbitrary) step axis."""
    if two_axes:
        step = pl.program_id(1)
        blk = pl.program_id(0) * steps + step          # global row-block index
    else:
        step = pl.program_id(0)
        blk = step

    @pl.when(step == 0)
    def _():
        out_ref[...] = jnp.zeros_like(out_ref)

    x = x_ref[...].astype(jnp.float32)                 # logits (tr, 128)
    t = t_ref[...]
    if jnp.issubdtype(t_ref.dtype, jnp.floating):
        # TODO(synk): hard-label fast path (matches targets.long() for {0,1});
        # soft targets would need the full 2-exp BCE path.
        y_pos = t > 0.5
    else:
        y_pos = t > 0

    # bce = max(x,0) - x*y + log1p(exp(-|x|))  (torch's stable formulation),
    # with max(x,0) - x*y fused into relu(x_signed), x_signed = (y ? -x : x).
    x_signed = jnp.where(y_pos, -x, x)
    e = jnp.exp(-jnp.abs(x))                                      # EUP exp
    bce = jnp.maximum(x_signed, 0.0) + jnp.log1p(e)               # EUP log1p

    # q = 1 - pt = 1 - exp(-bce). For hard labels exp(-relu(x_signed)) is 1
    # when the logit sign matches the label (x_signed <= 0), else e, hence
    #   q = (x_signed <= 0 ? e : 1) / (1 + e)
    # The divide is replaced by an approx EUP reciprocal + one Newton step.
    d = 1.0 + e
    r = pl.reciprocal(d, approx=True)                             # EUP vrcp
    r = r * (2.0 - d * r)              # Newton refine: ~1 ulp, pure VPU
    q = jnp.where(x_signed <= 0.0, e, jnp.float32(1.0)) * r

    # alpha-table gather: target==0 -> alpha, target==1 -> 1-alpha
    at = jnp.where(y_pos, jnp.float32(1.0 - ALPHA), jnp.float32(ALPHA))

    if GAMMA == 2:
        modulator = q * q          # explicit square: no pow -> no exp/log
    else:
        modulator = q ** GAMMA     # TODO(synk): non-integer gamma -> float pow

    f_loss = at * modulator * bce                      # (tr, 128)

    def _fold(vals):
        # vreg-aligned fold onto the resident (8,128) accumulator: pure VPU
        # adds; the single cross-lane reduce happens once, in the wrapper.
        out_ref[...] += jnp.sum(vals.reshape(tr // _SUB, _SUB, _LANE), axis=0)

    if full:                               # static: every block fully valid
        _fold(f_loss)
    else:
        rem = valid_rows - blk * tr        # rows of this block holding real data

        @pl.when(rem >= tr)
        def _():
            _fold(f_loss)

        @pl.when(rem < tr)
        def _():                            # ragged tail: mask Pallas OOB rows
            ridx = jax.lax.broadcasted_iota(jnp.int32, (tr, 1), 0)
            _fold(jnp.where(ridx < rem, f_loss, 0.0))


def _default_num_cores():
    """TensorCores per device: 2 on v7x-family, 1 elsewhere (v2-v6e expose 1)."""
    try:
        kind = jax.devices()[0].device_kind.lower()
    except Exception:
        return 1
    return 2 if ("v7" in kind or "tpu7" in kind) else 1


@functools.partial(jax.jit, static_argnames=("tile_rows", "num_cores"))
def focal_loss(inputs, targets, *, tile_rows=2048, num_cores=None):
    """Mean focal loss over all elements of `inputs`/`targets` (any shape)."""
    if num_cores is None:
        num_cores = _default_num_cores()

    x = inputs.reshape(-1)          # native dtype (bf16 logits pass through)
    t = targets.reshape(-1)         # native dtype: no wrapper cast pass
    if t.dtype == jnp.bool_:
        t = t.astype(jnp.int8)
    n = x.shape[0]

    # Only pad when n is not a multiple of 128 lanes, and then by <128 elems
    # with the zero-contribution pair (x=100, y=1) -> exactly 0 focal loss.
    lane_pad = (-n) % _LANE
    if lane_pad:
        # TODO(synk): XLA pad still copies the array; only hit when the flat
        # element count is not a multiple of 128.
        x = jnp.pad(x, (0, lane_pad), constant_values=100.0)
        t = jnp.pad(t, (0, lane_pad), constant_values=1)

    rows = (n + lane_pad) // _LANE
    # Never give a core an (almost) empty row range on tiny inputs.
    num_cores = max(1, min(num_cores, rows // _SUB))

    # Sublane packing of the narrowest input dtype: f32 -> 8, bf16 -> 16, i8 -> 32.
    sub = max(_SUB, 32 // x.dtype.itemsize, 32 // t.dtype.itemsize)
    tr = min(_round_up(tile_rows, sub),
             _round_up(pl.cdiv(rows, num_cores), sub))
    steps = pl.cdiv(rows, num_cores * tr)
    full = (rows == num_cores * steps * tr)      # static: tail masking needed?

    x2d = x.reshape(rows, _LANE)
    t2d = t.reshape(rows, _LANE)

    kernel = functools.partial(
        _focal_loss_kernel, valid_rows=rows, tr=tr, steps=steps,
        two_axes=(num_cores > 1), full=full)

    if num_cores > 1:
        grid = (num_cores, steps)
        in_idx = lambda c, i: (c * steps + i, 0)
        out_idx = lambda c, i: (c, 0)
        dims = (pltpu.CORE_PARALLEL, pltpu.ARBITRARY)   # engage both v7x TCs
    else:
        grid = (steps,)
        in_idx = lambda i: (i, 0)
        out_idx = lambda i: (0, 0)
        dims = (pltpu.ARBITRARY,)

    partial_sums = pl.pallas_call(
        kernel,
        out_shape=jax.ShapeDtypeStruct((num_cores * _SUB, _LANE), jnp.float32),
        grid_spec=pltpu.PrefetchScalarGridSpec(
            num_scalar_prefetch=0,
            grid=grid,
            in_specs=[pl.BlockSpec((tr, _LANE), in_idx),
                      pl.BlockSpec((tr, _LANE), in_idx)],
            out_specs=pl.BlockSpec((_SUB, _LANE), out_idx),
        ),
        compiler_params=pltpu.CompilerParams(
            dimension_semantics=dims,
            vmem_limit_bytes=32 * 1024 * 1024,   # > v5e's 16 MiB default window
        ),
    )(x2d, t2d)

    return jnp.sum(partial_sums) / jnp.float32(n)


def focal_loss_ref(inputs, targets):
    x = inputs.reshape(-1).astype(jnp.float32)
    y = targets.reshape(-1).astype(jnp.float32)
    bce = jnp.maximum(x, 0.0) - x * y + jnp.log1p(jnp.exp(-jnp.abs(x)))
    at = jnp.where(y > 0.5, 1.0 - ALPHA, ALPHA)
    pt = jnp.exp(-bce)
    return jnp.mean(at * (1.0 - pt) ** GAMMA * bce)


if __name__ == "__main__":
    # The module has no learnable weights; alpha table [0.25, 0.75] and gamma=2
    # are baked into the kernel as constants.
    key = jax.random.PRNGKey(0)
    k_x, k_t = jax.random.split(key)

    shape = (2, 4, 16, 16)   # batch=2, channels=4, spatial=16x16 -> 2048 logits
    logits = jax.random.normal(k_x, shape, dtype=jnp.float32) * 2.0
    targets = jax.random.bernoulli(k_t, p=0.3, shape=shape).astype(jnp.float32)

    loss = focal_loss(logits, targets)
    loss = jax.block_until_ready(loss)

    ref = focal_loss_ref(logits, targets)
    # rtol covers the Newton-refined approx reciprocal (~1 ulp in practice).
    assert jnp.allclose(loss, ref, rtol=2e-4, atol=1e-7), (loss, ref)

    print("KERNEL_OK")
</pallas_src>

<mosaic_0001>
module attributes {stable_mosaic.version = 11 : i64} {
  func.func @_focal_loss_kernel(%arg0: i32, %arg1: memref<16x128xf32, #tpu.memory_space<vmem>>, %arg2: memref<16x128xf32, #tpu.memory_space<vmem>>, %arg3: memref<8x128xf32, #tpu.memory_space<vmem>>) attributes {dimension_semantics = [#tpu.dimension_semantics<arbitrary>], iteration_bounds = array<i64: 1>, scalar_prefetch = 0 : i64, scratch_operands = 0 : i64, tpu.core_type = #tpu.core_type<tc>, window_params = [{transform_indices = @transform_0, window_bounds = array<i64: 16, 128>}, {transform_indices = @transform_1, window_bounds = array<i64: 16, 128>}, {pipeline_mode = #tpu.pipeline_mode<synchronous>, transform_indices = @transform_2, window_bounds = array<i64: 8, 128>}]} {
    %c0_i32 = arith.constant 0 : i32
    %0 = arith.cmpi eq, %arg0, %c0_i32 : i32
    %1 = arith.extui %0 : i1 to i32
    %c0_i32_0 = arith.constant 0 : i32
    %2 = arith.cmpi ne, %1, %c0_i32_0 : i32
    scf.if %2 {
      %cst_18 = arith.constant 0.000000e+00 : f32
      %41 = vector.broadcast %cst_18 : f32 to vector<8x128xf32>
      %c0_19 = arith.constant 0 : index
      %c0_20 = arith.constant 0 : index
      %42 = vector.load %arg3[%c0_19, %c0_20] : memref<8x128xf32, #tpu.memory_space<vmem>>, vector<8x128xf32>
      tpu.vector_store %arg3[%c0_19, %c0_20], %41 {strides = array<i32>} : memref<8x128xf32, #tpu.memory_space<vmem>>, vector<8x128xf32>,
    } else {
    }
    %c0 = arith.constant 0 : index
    %c0_1 = arith.constant 0 : index
    %3 = vector.load %arg1[%c0, %c0_1] : memref<16x128xf32, #tpu.memory_space<vmem>>, vector<16x128xf32>
    %c0_2 = arith.constant 0 : index
    %c0_3 = arith.constant 0 : index
    %4 = vector.load %arg2[%c0_2, %c0_3] : memref<16x128xf32, #tpu.memory_space<vmem>>, vector<16x128xf32>
    %cst = arith.constant 5.000000e-01 : f32
    %5 = vector.broadcast %cst : f32 to vector<16x128xf32>
    %6 = arith.cmpf ogt, %4, %5 : vector<16x128xf32>
    %cst_4 = arith.constant 0.000000e+00 : f32
    %7 = vector.broadcast %cst_4 : f32 to vector<16x128xf32>
    %8 = arith.subf %7, %3 : vector<16x128xf32>
    %9 = arith.select %6, %8, %3 : vector<16x128xi1>, vector<16x128xf32>
    %10 = math.absf %3 : vector<16x128xf32>
    %cst_5 = arith.constant 0.000000e+00 : f32
    %11 = vector.broadcast %cst_5 : f32 to vector<16x128xf32>
    %12 = arith.subf %11, %10 : vector<16x128xf32>
    %13 = math.exp %12 : vector<16x128xf32>
    %cst_6 = arith.constant 0.000000e+00 : f32
    %14 = vector.broadcast %cst_6 : f32 to vector<16x128xf32>
    %15 = arith.maximumf %9, %14 : vector<16x128xf32>
    %16 = math.log1p %13 : vector<16x128xf32>
    %17 = arith.addf %15, %16 : vector<16x128xf32>
    %cst_7 = arith.constant 1.000000e+00 : f32
    %18 = vector.broadcast %cst_7 : f32 to vector<16x128xf32>
    %19 = arith.addf %18, %13 : vector<16x128xf32>
    %20 = tpu.reciprocal %19 {approx = true} : vector<16x128xf32> -> vector<16x128xf32>
    %21 = arith.mulf %19, %20 : vector<16x128xf32>
    %cst_8 = arith.constant 2.000000e+00 : f32
    %22 = vector.broadcast %cst_8 : f32 to vector<16x128xf32>
    %23 = arith.subf %22, %21 : vector<16x128xf32>
    %24 = arith.mulf %20, %23 : vector<16x128xf32>
    %cst_9 = arith.constant 0.000000e+00 : f32
    %25 = vector.broadcast %cst_9 : f32 to vector<16x128xf32>
    %26 = arith.cmpf ole, %9, %25 : vector<16x128xf32>
    %cst_10 = arith.constant 1.000000e+00 : f32
    %27 = vector.broadcast %cst_10 : f32 to vector<16x128xf32>
    %28 = arith.select %26, %13, %27 : vector<16x128xi1>, vector<16x128xf32>
    %29 = arith.mulf %28, %24 : vector<16x128xf32>
    %cst_11 = arith.constant 7.500000e-01 : f32
    %cst_12 = arith.constant 2.500000e-01 : f32
    %30 = vector.broadcast %cst_11 : f32 to vector<16x128xf32>
    %31 = vector.broadcast %cst_12 : f32 to vector<16x128xf32>
    %32 = arith.select %6, %30, %31 : vector<16x128xi1>, vector<16x128xf32>
    %33 = arith.mulf %29, %29 : vector<16x128xf32>
    %34 = arith.mulf %32, %33 : vector<16x128xf32>
    %35 = arith.mulf %34, %17 : vector<16x128xf32>
    %c0_13 = arith.constant 0 : index
    %c0_14 = arith.constant 0 : index
    %36 = vector.load %arg3[%c0_13, %c0_14] : memref<8x128xf32, #tpu.memory_space<vmem>>, vector<8x128xf32>
    %37 = vector.shape_cast %35 : vector<16x128xf32> to vector<2x8x128xf32>
    %cst_15 = arith.constant dense<0.000000e+00> : vector<8x128xf32>
    %38 = vector.multi_reduction <add>, %37, %cst_15 [0] : vector<2x8x128xf32> to vector<8x128xf32>
    %39 = arith.addf %36, %38 : vector<8x128xf32>
    %c0_16 = arith.constant 0 : index
    %c0_17 = arith.constant 0 : index
    %40 = vector.load %arg3[%c0_16, %c0_17] : memref<8x128xf32, #tpu.memory_space<vmem>>, vector<8x128xf32>
    tpu.vector_store %arg3[%c0_16, %c0_17], %39 {strides = array<i32>} : memref<8x128xf32, #tpu.memory_space<vmem>>, vector<8x128xf32>,
    return
  }
  func.func @transform_0(%arg0: i32) -> (i32, i32) {
    %c0_i32 = arith.constant 0 : i32
    %c0_i32_0 = arith.constant 0 : i32
    return %arg0, %c0_i32 : i32, i32
  }
  func.func @transform_1(%arg0: i32) -> (i32, i32) {
    %c0_i32 = arith.constant 0 : i32
    %c0_i32_0 = arith.constant 0 : i32
    return %arg0, %c0_i32 : i32, i32
  }
  func.func @transform_2(%arg0: i32) -> (i32, i32) {
    %c0_i32 = arith.constant 0 : i32
    %c0_i32_0 = arith.constant 0 : i32
    %c0_i32_1 = arith.constant 0 : i32
    return %c0_i32, %c0_i32_0 : i32, i32
  }
}

</mosaic_0001>

<llo_original>
// kernel: focal_loss.1
$region0: #{focal_loss.1}
  #allocation0 [shape = 'u32[]', space=smem, size = 0x4, offset = 0x4, fixed_abs, tag = 'smem constant byte address 0x4 - core index']
  #allocation1 [shape = 'u32[144,128]{1,0:T(1,128)}', space=vmem, size = 0x12000, scoped, tag = 'internal scratch']
  %s0 = inlined_call_operand.vmem [shape: f32[16,128], index: 0, kind: input, shape index: {}]
  %s1 = inlined_call_operand.vmem [shape: f32[16,128], index: 1, kind: input, shape index: {}]
  %s2 = inlined_call_operand.vmem [shape: f32[8,128], index: 2, kind: output, shape index: {}]
  %s3 = sld [smem:[#allocation0]]
  $region22: #{focal_loss.1} parent=0
    _
  %s5 = ssub.s32 1, %s3
  %s6 = scalar_select 0, %s5, %s3
  // Predicated region
  $region2: #{focal_loss.1} parent=0 // pred_check
    _
  $region3: #{focal_loss.1} parent=0 // pred_check_branch
    %8 = sbr.rel (0) target = $region5
  $region4: #{focal_loss.1} parent=0 // pred_region
    _
  $region5: #{focal_loss.1} parent=0 // pred_fallthru
    _
  // Predicated region
  $region6: #{focal_loss.1} parent=0 // pred_check
    _
  $region7: #{focal_loss.1} parent=0 // pred_check_branch
    %10 = sbr.rel (0) target = $region9
  $region8: #{focal_loss.1} parent=0 // pred_region
    _
  $region9: #{focal_loss.1} parent=0 // pred_fallthru
    _
  %p11 = scmp.eq.s32.totalorder 0, 0
  // Predicated region
  $region10: #{focal_loss.1} parent=0 // pred_check
    %p12 = pneg %p11
  $region11: #{focal_loss.1} parent=0 // pred_check_branch
    %14 = sbr.rel (%p12) target = $region13
  $region12: #{focal_loss.1} parent=0 // pred_region
    %15 = vst [vmem:[%s2] sm:$0xff] 0.0
  $region13: #{focal_loss.1} parent=0 // pred_fallthru
    _
  %v16 = vld [vmem:[%s0] sm:$0xff]
  %v17 = vld [vmem:[%s0 + $0x8] sm:$0xff]
  %v18 = vld [vmem:[%s1] sm:$0xff]
  %v19 = vld [vmem:[%s1 + $0x8] sm:$0xff]
  %vm20 = vcmp.gt.f32.partialorder %v18, 0.5
  %vm21 = vcmp.gt.f32.partialorder %v19, 0.5
  %v22 = vsub.f32 0.0, %v16
  %v23 = vsub.f32 0.0, %v17
  %v24 = vsel %vm20, %v22, %v16
  %v25 = vsel %vm21, %v23, %v17
  %v26 = vand.u32 2147483647, %v16
  %v27 = vand.u32 2147483647, %v17
  %v28 = vsub.f32 0.0, %v26
  %v29 = vsub.f32 0.0, %v27
  %v30 = vmul.f32 %v28, 1.442695
  %v31 = vpow.pop %v30
  %v32 = vmul.f32 %v29, 1.442695
  %v33 = vpow.pop %v32
  %v34 = vmax.f32 %v24, 0.0
  %v35 = vmax.f32 %v25, 0.0
  %v36 = vadd.f32 %v31, 1.0
  %v37 = vlog2.pop %v36
  %v38 = vmul.f32 %v37, 0.6931472
  %v39 = vmul.f32 -0.5, %v31
  %v40 = vadd.f32 %v39, 1.0
  %v41 = vmul.f32 %v40, %v31
  %v42 = vand.u32 2147483647, %v31
  %vm43 = vcmp.lt.f32.partialorder %v42, 0.0004427343
  %v44 = vsel %vm43, %v41, %v38
  %v45 = vadd.f32 %v33, 1.0
  %v46 = vlog2.pop %v45
  %v47 = vmul.f32 %v46, 0.6931472
  %v48 = vmul.f32 -0.5, %v33
  %v49 = vadd.f32 %v48, 1.0
  %v50 = vmul.f32 %v49, %v33
  %v51 = vand.u32 2147483647, %v33
  %vm52 = vcmp.lt.f32.partialorder %v51, 0.0004427343
  %v53 = vsel %vm52, %v50, %v47
  %v54 = vadd.f32 %v34, %v44
  %v55 = vadd.f32 %v35, %v53
  %v56 = vadd.f32 %v31, 1.0
  %v57 = vadd.f32 %v33, 1.0
  %v58 = vrcp.pop %v56
  %v59 = vrcp.pop %v57
  %v60 = vmul.f32 %v56, %v58
  %v61 = vmul.f32 %v57, %v59
  %v62 = vsub.f32 2.0, %v60
  %v63 = vsub.f32 2.0, %v61
  %v64 = vmul.f32 %v58, %v62
  %v65 = vmul.f32 %v59, %v63
  %vm66 = vcmp.le.f32.partialorder %v24, 0.0
  %vm67 = vcmp.le.f32.partialorder %v25, 0.0
  %v68 = vsel %vm66, %v31, 1.0
  %v69 = vsel %vm67, %v33, 1.0
  %v70 = vmul.f32 %v68, %v64
  %v71 = vmul.f32 %v69, %v65
  %v72 = vsel %vm20, 0.75, 0.25
  %v73 = vsel %vm21, 0.75, 0.25
  %v74 = vmul.f32 %v70, %v70
  %v75 = vmul.f32 %v71, %v71
  %v76 = vmul.f32 %v72, %v74
  %v77 = vmul.f32 %v73, %v75
  %v78 = vmul.f32 %v76, %v54
  %v79 = vmul.f32 %v77, %v55
  %v80 = vld [vmem:[%s2] sm:$0xff]
  %v81 = vadd.f32 %v78, %v79
  %v82 = vadd.f32 %v80, %v81
  %83 = vst [vmem:[%s2] sm:$0xff] %v82
  // Predicated region
  $region14: #{focal_loss.1} parent=0 // pred_check
    _
  $region15: #{focal_loss.1} parent=0 // pred_check_branch
    %85 = sbr.rel (0) target = $region17
  $region16: #{focal_loss.1} parent=0 // pred_region
    _
  $region17: #{focal_loss.1} parent=0 // pred_fallthru
    _
  // Predicated region
  $region18: #{focal_loss.1} parent=0 // pred_check
    _
  $region19: #{focal_loss.1} parent=0 // pred_check_branch
    %87 = sbr.rel (0) target = $region21
  $region20: #{focal_loss.1} parent=0 // pred_region
    _
  $region21: #{focal_loss.1} parent=0 // pred_fallthru
    _

</llo_original>
